<compile_context>
chip_gen: v5e
topology: v5e:2x2
jax: 0.10.0
libtpu: 0.0.40
codegen_flags: <defaults>
</compile_context>

<pallas_src>
import functools

import jax
import jax.numpy as jnp
from jax.experimental import pallas as pl
from jax.experimental.pallas import tpu as pltpu


def _round_up(n, m):
    return ((n + m - 1) // m) * m


def _pad2(a, rows, cols):
    return jnp.pad(a, ((0, rows - a.shape[0]), (0, cols - a.shape[1])))


def _mlp_kernel(x_ref, w1_ref, b1_ref, w2_ref, b2_ref, w3_ref, b3_ref, o_ref):
    # Layer 1: Linear + ReLU (dropout == identity at inference).
    h = jnp.dot(x_ref[...], w1_ref[...], preferred_element_type=jnp.float32)
    h = jnp.maximum(h + b1_ref[...], 0.0)            # (TB, Hp) + (1, Hp)

    # Layer 2: Linear + ReLU.
    h = jnp.dot(h.astype(w2_ref.dtype), w2_ref[...],
                preferred_element_type=jnp.float32)
    h = jnp.maximum(h + b2_ref[...], 0.0)

    # Output layer (N = O, unpadded -> tiny HBM writeback).
    y = jnp.dot(h.astype(w3_ref.dtype), w3_ref[...],
                preferred_element_type=jnp.float32)
    o_ref[...] = (y + b3_ref[...]).astype(o_ref.dtype)


def prepare_params(w1, b1, w2, b2, w3, b3, compute_dtype=jnp.bfloat16):
    """One-time padding/casting of parameters (hoisted out of the forward).

    w1: (F, H)  b1: (1, H)
    w2: (H, H)  b2: (1, H)
    w3: (H, O)  b3: (1, O)

    H is padded to a multiple of 128 lanes (zero pad => numerically exact:
    padded h columns are relu(0 + 0) = 0 and meet zero rows of w2/w3).
    F and O are left unpadded.
    """
    F, H = w1.shape
    O = w3.shape[1]
    H_p = _round_up(H, 128)

    w1_p = _pad2(w1, F, H_p).astype(compute_dtype)
    w2_p = _pad2(w2, H_p, H_p).astype(compute_dtype)
    w3_p = _pad2(w3, H_p, O).astype(compute_dtype)
    b1_p = _pad2(b1, 1, H_p).astype(jnp.float32)
    b2_p = _pad2(b2, 1, H_p).astype(jnp.float32)
    b3_p = b3.astype(jnp.float32)
    return w1_p, b1_p, w2_p, b2_p, w3_p, b3_p


@functools.partial(jax.jit, static_argnames=("max_block_b",))
def deephit_net_forward(x, w1_p, b1_p, w2_p, b2_p, w3_p, b3_p, *,
                        max_block_b=1024):
    """Fused 3-layer MLP forward.

    x: (B, F) float32; params as returned by prepare_params().
    Returns (B, O) float32.
    """
    B, F = x.shape
    H_p = w1_p.shape[1]
    O = w3_p.shape[1]
    compute_dtype = w1_p.dtype

    # Batch tiling: multiples of 16 rows (bf16 sublane packing). Once the
    # batch is big enough, split it so there are >=2 grid steps ("parallel"
    # axis -> both v7x TensorCores); large batches still get big 1024-row
    # tiles to amortize per-step overhead on v5e/v6e.
    if B >= 32:
        block_b = min(max_block_b, _round_up(-(-B // 2), 16))
    else:
        block_b = min(max_block_b, _round_up(B, 16))
    B_p = _round_up(B, block_b)

    # Cast to bf16 first (pad moves 2-byte data), keep F unpadded.
    x_p = x.astype(compute_dtype)
    if B_p != B:
        x_p = jnp.pad(x_p, ((0, B_p - B), (0, 0)))

    grid = (B_p // block_b,)

    # Constant-index blocks (weights/biases) stay VMEM-resident across steps.
    const = lambda shape: pl.BlockSpec(shape, lambda i: (0, 0))

    out_p = pl.pallas_call(
        _mlp_kernel,
        out_shape=jax.ShapeDtypeStruct((B_p, O), jnp.float32),
        grid_spec=pltpu.PrefetchScalarGridSpec(
            num_scalar_prefetch=0,
            grid=grid,
            in_specs=[
                pl.BlockSpec((block_b, F), lambda i: (i, 0)),  # x tile (F unpadded)
                const((F, H_p)), const((1, H_p)),              # layer 1
                const((H_p, H_p)), const((1, H_p)),            # layer 2
                const((H_p, O)), const((1, O)),                # layer 3 (O unpadded)
            ],
            out_specs=pl.BlockSpec((block_b, O), lambda i: (i, 0)),
        ),
        compiler_params=pltpu.CompilerParams(
            dimension_semantics=("parallel",)),
    )(x_p, w1_p, b1_p, w2_p, b2_p, w3_p, b3_p)

    return out_p[:B] if B_p != B else out_p


def init_params(key, in_features, hidden_features, out_features):
    """Deterministic PyTorch-style (Kaiming-uniform-ish) init, stored as
    (fan_in, fan_out) so the kernel does x @ W."""
    ks = jax.random.split(key, 6)

    def linear(kw, kb, fan_in, fan_out):
        bound = 1.0 / jnp.sqrt(jnp.float32(fan_in))
        w = jax.random.uniform(kw, (fan_in, fan_out), jnp.float32, -bound, bound)
        b = jax.random.uniform(kb, (1, fan_out), jnp.float32, -bound, bound)
        return w, b

    w1, b1 = linear(ks[0], ks[1], in_features, hidden_features)
    w2, b2 = linear(ks[2], ks[3], hidden_features, hidden_features)
    w3, b3 = linear(ks[4], ks[5], hidden_features, out_features)
    return w1, b1, w2, b2, w3, b3


def _ref_forward(x, params, compute_dtype):
    """Pure-JAX reference using the same bf16-in / f32-accumulate recipe."""
    w1, b1, w2, b2, w3, b3 = params
    cd = compute_dtype
    h = jnp.dot(x.astype(cd), w1.astype(cd),
                preferred_element_type=jnp.float32) + b1
    h = jnp.maximum(h, 0.0)
    h = jnp.dot(h.astype(cd), w2.astype(cd),
                preferred_element_type=jnp.float32) + b2
    h = jnp.maximum(h, 0.0)
    return jnp.dot(h.astype(cd), w3.astype(cd),
                   preferred_element_type=jnp.float32) + b3


if __name__ == "__main__":
    key = jax.random.PRNGKey(0)
    k_x, k_p = jax.random.split(key)

    batch = 8
    in_features = 16
    hidden_features = 32
    out_features = 4

    x = jax.random.normal(k_x, (batch, in_features), jnp.float32)
    raw_params = init_params(k_p, in_features, hidden_features, out_features)
    padded_params = prepare_params(*raw_params)

    out = deephit_net_forward(x, *padded_params)
    out = jax.block_until_ready(out)

    ref = _ref_forward(x, raw_params, jnp.bfloat16)
    assert out.shape == (batch, out_features)
    assert jnp.allclose(out, ref, atol=1e-2, rtol=1e-2), (
        float(jnp.max(jnp.abs(out - ref))))

    print("KERNEL_OK")
</pallas_src>

<mosaic_0001>
module attributes {stable_mosaic.version = 11 : i64} {
  func.func @_mlp_kernel(%arg0: i32, %arg1: memref<16x16xbf16, #tpu.memory_space<vmem>>, %arg2: memref<16x128xbf16, #tpu.memory_space<vmem>>, %arg3: memref<1x128xf32, #tpu.memory_space<vmem>>, %arg4: memref<128x128xbf16, #tpu.memory_space<vmem>>, %arg5: memref<1x128xf32, #tpu.memory_space<vmem>>, %arg6: memref<128x4xbf16, #tpu.memory_space<vmem>>, %arg7: memref<1x4xf32, #tpu.memory_space<vmem>>, %arg8: memref<16x4xf32, #tpu.memory_space<vmem>>) attributes {dimension_semantics = [#tpu.dimension_semantics<parallel>], iteration_bounds = array<i64: 1>, scalar_prefetch = 0 : i64, scratch_operands = 0 : i64, tpu.core_type = #tpu.core_type<tc>, window_params = [{transform_indices = @transform_0, window_bounds = array<i64: 16, 16>}, {pipeline_mode = #tpu.pipeline_mode<synchronous>, transform_indices = @transform_1, window_bounds = array<i64: 16, 128>}, {pipeline_mode = #tpu.pipeline_mode<synchronous>, transform_indices = @transform_2, window_bounds = array<i64: 1, 128>}, {pipeline_mode = #tpu.pipeline_mode<synchronous>, transform_indices = @transform_3, window_bounds = array<i64: 128, 128>}, {pipeline_mode = #tpu.pipeline_mode<synchronous>, transform_indices = @transform_4, window_bounds = array<i64: 1, 128>}, {pipeline_mode = #tpu.pipeline_mode<synchronous>, transform_indices = @transform_5, window_bounds = array<i64: 128, 4>}, {pipeline_mode = #tpu.pipeline_mode<synchronous>, transform_indices = @transform_6, window_bounds = array<i64: 1, 4>}, {transform_indices = @transform_7, window_bounds = array<i64: 16, 4>}]} {
    %c0 = arith.constant 0 : index
    %c0_0 = arith.constant 0 : index
    %0 = vector.load %arg1[%c0, %c0_0] : memref<16x16xbf16, #tpu.memory_space<vmem>>, vector<16x16xbf16>
    %c0_1 = arith.constant 0 : index
    %c0_2 = arith.constant 0 : index
    %1 = vector.load %arg2[%c0_1, %c0_2] : memref<16x128xbf16, #tpu.memory_space<vmem>>, vector<16x128xbf16>
    %cst = arith.constant dense<0.000000e+00> : vector<16x128xf32>
    %2 = tpu.matmul %0, %1, %cst {dimension_numbers = #tpu.dot_dimension_numbers<[1], [0], [0], [1], [0, 0, 1, 1], [], []>} : vector<16x16xbf16>, vector<16x128xbf16>, vector<16x128xf32> -> vector<16x128xf32>
    %c0_3 = arith.constant 0 : index
    %c0_4 = arith.constant 0 : index
    %3 = vector.load %arg3[%c0_3, %c0_4] : memref<1x128xf32, #tpu.memory_space<vmem>>, vector<1x128xf32>
    %4 = vector.broadcast %3 : vector<1x128xf32> to vector<16x128xf32>
    %5 = arith.addf %2, %4 : vector<16x128xf32>
    %cst_5 = arith.constant 0.000000e+00 : f32
    %6 = vector.broadcast %cst_5 : f32 to vector<16x128xf32>
    %7 = arith.maximumf %5, %6 : vector<16x128xf32>
    %8 = arith.truncf %7 : vector<16x128xf32> to vector<16x128xbf16>
    %c0_6 = arith.constant 0 : index
    %c0_7 = arith.constant 0 : index
    %9 = vector.load %arg4[%c0_6, %c0_7] : memref<128x128xbf16, #tpu.memory_space<vmem>>, vector<128x128xbf16>
    %cst_8 = arith.constant dense<0.000000e+00> : vector<16x128xf32>
    %10 = tpu.matmul %8, %9, %cst_8 {dimension_numbers = #tpu.dot_dimension_numbers<[1], [0], [0], [1], [0, 0, 1, 1], [], []>} : vector<16x128xbf16>, vector<128x128xbf16>, vector<16x128xf32> -> vector<16x128xf32>
    %c0_9 = arith.constant 0 : index
    %c0_10 = arith.constant 0 : index
    %11 = vector.load %arg5[%c0_9, %c0_10] : memref<1x128xf32, #tpu.memory_space<vmem>>, vector<1x128xf32>
    %12 = vector.broadcast %11 : vector<1x128xf32> to vector<16x128xf32>
    %13 = arith.addf %10, %12 : vector<16x128xf32>
    %cst_11 = arith.constant 0.000000e+00 : f32
    %14 = vector.broadcast %cst_11 : f32 to vector<16x128xf32>
    %15 = arith.maximumf %13, %14 : vector<16x128xf32>
    %16 = arith.truncf %15 : vector<16x128xf32> to vector<16x128xbf16>
    %c0_12 = arith.constant 0 : index
    %c0_13 = arith.constant 0 : index
    %17 = vector.load %arg6[%c0_12, %c0_13] : memref<128x4xbf16, #tpu.memory_space<vmem>>, vector<128x4xbf16>
    %cst_14 = arith.constant dense<0.000000e+00> : vector<16x4xf32>
    %18 = tpu.matmul %16, %17, %cst_14 {dimension_numbers = #tpu.dot_dimension_numbers<[1], [0], [0], [1], [0, 0, 1, 1], [], []>} : vector<16x128xbf16>, vector<128x4xbf16>, vector<16x4xf32> -> vector<16x4xf32>
    %c0_15 = arith.constant 0 : index
    %c0_16 = arith.constant 0 : index
    %19 = vector.load %arg7[%c0_15, %c0_16] : memref<1x4xf32, #tpu.memory_space<vmem>>, vector<1x4xf32>
    %20 = vector.broadcast %19 : vector<1x4xf32> to vector<16x4xf32>
    %21 = arith.addf %18, %20 : vector<16x4xf32>
    %c0_17 = arith.constant 0 : index
    %c0_18 = arith.constant 0 : index
    %22 = vector.load %arg8[%c0_17, %c0_18] : memref<16x4xf32, #tpu.memory_space<vmem>>, vector<16x4xf32>
    tpu.vector_store %arg8[%c0_17, %c0_18], %21 {strides = array<i32>} : memref<16x4xf32, #tpu.memory_space<vmem>>, vector<16x4xf32>,
    return
  }
  func.func @transform_0(%arg0: i32) -> (i32, i32) {
    %c0_i32 = arith.constant 0 : i32
    %c0_i32_0 = arith.constant 0 : i32
    return %arg0, %c0_i32 : i32, i32
  }
  func.func @transform_1(%arg0: i32) -> (i32, i32) {
    %c0_i32 = arith.constant 0 : i32
    %c0_i32_0 = arith.constant 0 : i32
    %c0_i32_1 = arith.constant 0 : i32
    return %c0_i32, %c0_i32_0 : i32, i32
  }
  func.func @transform_2(%arg0: i32) -> (i32, i32) {
    %c0_i32 = arith.constant 0 : i32
    %c0_i32_0 = arith.constant 0 : i32
    %c0_i32_1 = arith.constant 0 : i32
    return %c0_i32, %c0_i32_0 : i32, i32
  }
  func.func @transform_3(%arg0: i32) -> (i32, i32) {
    %c0_i32 = arith.constant 0 : i32
    %c0_i32_0 = arith.constant 0 : i32
    %c0_i32_1 = arith.constant 0 : i32
    return %c0_i32, %c0_i32_0 : i32, i32
  }
  func.func @transform_4(%arg0: i32) -> (i32, i32) {
    %c0_i32 = arith.constant 0 : i32
    %c0_i32_0 = arith.constant 0 : i32
    %c0_i32_1 = arith.constant 0 : i32
    return %c0_i32, %c0_i32_0 : i32, i32
  }
  func.func @transform_5(%arg0: i32) -> (i32, i32) {
    %c0_i32 = arith.constant 0 : i32
    %c0_i32_0 = arith.constant 0 : i32
    %c0_i32_1 = arith.constant 0 : i32
    return %c0_i32, %c0_i32_0 : i32, i32
  }
  func.func @transform_6(%arg0: i32) -> (i32, i32) {
    %c0_i32 = arith.constant 0 : i32
    %c0_i32_0 = arith.constant 0 : i32
    %c0_i32_1 = arith.constant 0 : i32
    return %c0_i32, %c0_i32_0 : i32, i32
  }
  func.func @transform_7(%arg0: i32) -> (i32, i32) {
    %c0_i32 = arith.constant 0 : i32
    %c0_i32_0 = arith.constant 0 : i32
    return %arg0, %c0_i32 : i32, i32
  }
}

</mosaic_0001>

<llo_original>
// kernel: deephit_net_forward.1
$region0: #{deephit_net_forward.1}
  #allocation0 [shape = 'u32[]', space=smem, size = 0x4, offset = 0x4, fixed_abs, tag = 'smem constant byte address 0x4 - core index']
  #allocation1 [shape = 'u32[72,128]{1,0:T(1,128)}', space=vmem, size = 0x9000, scoped, tag = 'internal scratch']
  %s0 = inlined_call_operand.vmem [shape: bf16[16,16], index: 0, kind: input, shape index: {}]
  %s1 = inlined_call_operand.vmem [shape: bf16[16,128], index: 1, kind: input, shape index: {}]
  %s2 = inlined_call_operand.vmem [shape: f32[1,128], index: 2, kind: input, shape index: {}]
  %s3 = inlined_call_operand.vmem [shape: bf16[128,128], index: 3, kind: input, shape index: {}]
  %s4 = inlined_call_operand.vmem [shape: f32[1,128], index: 4, kind: input, shape index: {}]
  %s5 = inlined_call_operand.vmem [shape: bf16[128,4], index: 5, kind: input, shape index: {}]
  %s6 = inlined_call_operand.vmem [shape: f32[1,4], index: 6, kind: input, shape index: {}]
  %s7 = inlined_call_operand.vmem [shape: f32[16,4], index: 7, kind: output, shape index: {}]
  %s8 = sld [smem:[#allocation0]]
  $region38: #{deephit_net_forward.1} parent=0
    _
  %s10 = ssub.s32 1, %s8
  %s11 = scalar_select 0, %s10, %s8
  // Predicated region
  $region2: #{deephit_net_forward.1} parent=0 // pred_check
    _
  $region3: #{deephit_net_forward.1} parent=0 // pred_check_branch
    %13 = sbr.rel (0) target = $region5
  $region4: #{deephit_net_forward.1} parent=0 // pred_region
    _
  $region5: #{deephit_net_forward.1} parent=0 // pred_fallthru
    _
  // Predicated region
  $region6: #{deephit_net_forward.1} parent=0 // pred_check
    _
  $region7: #{deephit_net_forward.1} parent=0 // pred_check_branch
    %15 = sbr.rel (0) target = $region9
  $region8: #{deephit_net_forward.1} parent=0 // pred_region
    _
  $region9: #{deephit_net_forward.1} parent=0 // pred_fallthru
    _
  // Predicated region
  $region10: #{deephit_net_forward.1} parent=0 // pred_check
    _
  $region11: #{deephit_net_forward.1} parent=0 // pred_check_branch
    %17 = sbr.rel (0) target = $region13
  $region12: #{deephit_net_forward.1} parent=0 // pred_region
    _
  $region13: #{deephit_net_forward.1} parent=0 // pred_fallthru
    _
  // Predicated region
  $region14: #{deephit_net_forward.1} parent=0 // pred_check
    _
  $region15: #{deephit_net_forward.1} parent=0 // pred_check_branch
    %19 = sbr.rel (0) target = $region17
  $region16: #{deephit_net_forward.1} parent=0 // pred_region
    _
  $region17: #{deephit_net_forward.1} parent=0 // pred_fallthru
    _
  // Predicated region
  $region18: #{deephit_net_forward.1} parent=0 // pred_check
    _
  $region19: #{deephit_net_forward.1} parent=0 // pred_check_branch
    %21 = sbr.rel (0) target = $region21
  $region20: #{deephit_net_forward.1} parent=0 // pred_region
    _
  $region21: #{deephit_net_forward.1} parent=0 // pred_fallthru
    _
  // Predicated region
  $region22: #{deephit_net_forward.1} parent=0 // pred_check
    _
  $region23: #{deephit_net_forward.1} parent=0 // pred_check_branch
    %23 = sbr.rel (0) target = $region25
  $region24: #{deephit_net_forward.1} parent=0 // pred_region
    _
  $region25: #{deephit_net_forward.1} parent=0 // pred_fallthru
    _
  // Predicated region
  $region26: #{deephit_net_forward.1} parent=0 // pred_check
    _
  $region27: #{deephit_net_forward.1} parent=0 // pred_check_branch
    %25 = sbr.rel (0) target = $region29
  $region28: #{deephit_net_forward.1} parent=0 // pred_region
    _
  $region29: #{deephit_net_forward.1} parent=0 // pred_fallthru
    _
  %v27 = vld [vmem:[%s0] sm:$0xf]
  %v28 = vld [vmem:[%s0 + $0x4] sm:$0xf]
  %v29 = vld [vmem:[%s1] sm:$0xf]
  %v30 = vld [vmem:[%s1 + $0x4] sm:$0xf]
  %v31 = vld [vmem:[%s2] sm:$0x1]
  %v33 = vperm.slane %v31, 0
  %v37 = vunpack.c.l.b16 %v27
  %v38 = vunpack.c.l.b16 %v28
  %v39 = vpack.c.b16 %v38, %v37
  %v42 = vunpack.c.l.b16 %v29
  %v43 = vunpack.c.l.b16 %v30
  %v44 = vpack.c.b16 %v43, %v42
  %vm46 = vcmask 130048
  %v48 = vsel %vm46, %v39, 0
  %50 = vmatpush.bf16.msra.mxu0 0
  %51 = vmatpush.bf16.msra.mxu0 0
  %52 = vmatpush.bf16.msra.mxu0 0
  %53 = vmatpush.bf16.msra.mxu0 0
  %54 = vmatpush.bf16.msra.mxu0 0
  %55 = vmatpush.bf16.msra.mxu0 0
  %56 = vmatpush.bf16.msra.mxu0 0
  %57 = vmatpush.bf16.msra.mxu0 %v44
  %58 = vmatmul.bf16.gmra.mxu0 %v48
  %v59 = vpop.f32.mrf.mxu0
  %v60 = vadd.f32 %v33, %v59
  %v61 = vpop.f32.mrf.mxu0
  %v62 = vadd.f32 %v33, %v61
  %63 = vdwg.mxu0
  %v64 = vmax.f32 %v60, 0.0
  %v65 = vmax.f32 %v62, 0.0
  %v66 = vpack.c.bf16 %v65, %v64
  %v67 = vld [vmem:[%s3] sm:$0xf]
  %v68 = vld [vmem:[%s3 + $0x4] sm:$0xf]
  %v69 = vld [vmem:[%s3 + $0x8] sm:$0xf]
  %v70 = vld [vmem:[%s3 + $0xc] sm:$0xf]
  %v71 = vld [vmem:[%s3 + $0x10] sm:$0xf]
  %v72 = vld [vmem:[%s3 + $0x14] sm:$0xf]
  %v73 = vld [vmem:[%s3 + $0x18] sm:$0xf]
  %v74 = vld [vmem:[%s3 + $0x1c] sm:$0xf]
  %v75 = vld [vmem:[%s3 + $0x20] sm:$0xf]
  %v76 = vld [vmem:[%s3 + $0x24] sm:$0xf]
  %v77 = vld [vmem:[%s3 + $0x28] sm:$0xf]
  %v78 = vld [vmem:[%s3 + $0x2c] sm:$0xf]
  %v79 = vld [vmem:[%s3 + $0x30] sm:$0xf]
  %v80 = vld [vmem:[%s3 + $0x34] sm:$0xf]
  %v81 = vld [vmem:[%s3 + $0x38] sm:$0xf]
  %v82 = vld [vmem:[%s3 + $0x3c] sm:$0xf]
  %v83 = vld [vmem:[%s4] sm:$0x1]
  %v85 = vperm.slane %v83, 0
  %v103 = vunpack.c.l.b16 %v67
  %v104 = vunpack.c.l.b16 %v68
  %v105 = vunpack.c.l.b16 %v69
  %v106 = vunpack.c.l.b16 %v70
  %v107 = vunpack.c.l.b16 %v71
  %v108 = vunpack.c.l.b16 %v72
  %v109 = vunpack.c.l.b16 %v73
  %v110 = vunpack.c.l.b16 %v74
  %v111 = vunpack.c.l.b16 %v75
  %v112 = vunpack.c.l.b16 %v76
  %v113 = vunpack.c.l.b16 %v77
  %v114 = vunpack.c.l.b16 %v78
  %v115 = vunpack.c.l.b16 %v79
  %v116 = vunpack.c.l.b16 %v80
  %v117 = vunpack.c.l.b16 %v81
  %v118 = vunpack.c.l.b16 %v82
  %v119 = vpack.c.b16 %v104, %v103
  %v120 = vpack.c.b16 %v106, %v105
  %v121 = vpack.c.b16 %v108, %v107
  %v122 = vpack.c.b16 %v110, %v109
  %v123 = vpack.c.b16 %v112, %v111
  %v124 = vpack.c.b16 %v114, %v113
  %v125 = vpack.c.b16 %v116, %v115
  %v126 = vpack.c.b16 %v118, %v117
  %135 = vmatpush.bf16.msra.mxu0 %v126
  %136 = vmatpush.bf16.msra.mxu0 %v125
  %137 = vmatpush.bf16.msra.mxu0 %v124
  %138 = vmatpush.bf16.msra.mxu0 %v123
  %139 = vmatpush.bf16.msra.mxu0 %v122
  %140 = vmatpush.bf16.msra.mxu0 %v121
  %141 = vmatpush.bf16.msra.mxu0 %v120
  %142 = vmatpush.bf16.msra.mxu0 %v119
  %143 = vmatmul.bf16.gmra.mxu0 %v66
  %v144 = vpop.f32.mrf.mxu0
  %v145 = vadd.f32 %v85, %v144
  %v146 = vpop.f32.mrf.mxu0
  %v147 = vadd.f32 %v85, %v146
  %148 = vdwg.mxu0
  %v149 = vmax.f32 %v145, 0.0
  %v150 = vmax.f32 %v147, 0.0
  %v151 = vpack.c.bf16 %v150, %v149
  %v152 = vld [vmem:[%s5] sm:$0xf]
  %v153 = vld [vmem:[%s5 + $0x4] sm:$0xf]
  %v154 = vld [vmem:[%s5 + $0x8] sm:$0xf]
  %v155 = vld [vmem:[%s5 + $0xc] sm:$0xf]
  %v156 = vld [vmem:[%s5 + $0x10] sm:$0xf]
  %v157 = vld [vmem:[%s5 + $0x14] sm:$0xf]
  %v158 = vld [vmem:[%s5 + $0x18] sm:$0xf]
  %v159 = vld [vmem:[%s5 + $0x1c] sm:$0xf]
  %v160 = vld [vmem:[%s5 + $0x20] sm:$0xf]
  %v161 = vld [vmem:[%s5 + $0x24] sm:$0xf]
  %v162 = vld [vmem:[%s5 + $0x28] sm:$0xf]
  %v163 = vld [vmem:[%s5 + $0x2c] sm:$0xf]
  %v164 = vld [vmem:[%s5 + $0x30] sm:$0xf]
  %v165 = vld [vmem:[%s5 + $0x34] sm:$0xf]
  %v166 = vld [vmem:[%s5 + $0x38] sm:$0xf]
  %v167 = vld [vmem:[%s5 + $0x3c] sm:$0xf]
  %v168 = vld [vmem:[%s6] sm:$0x1]
  %v170 = vperm.slane %v168, 0
  %v188 = vunpack.c.l.b16 %v152
  %v189 = vunpack.c.l.b16 %v153
  %v190 = vunpack.c.l.b16 %v154
  %v191 = vunpack.c.l.b16 %v155
  %v192 = vunpack.c.l.b16 %v156
  %v193 = vunpack.c.l.b16 %v157
  %v194 = vunpack.c.l.b16 %v158
  %v195 = vunpack.c.l.b16 %v159
  %v196 = vunpack.c.l.b16 %v160
  %v197 = vunpack.c.l.b16 %v161
  %v198 = vunpack.c.l.b16 %v162
  %v199 = vunpack.c.l.b16 %v163
  %v200 = vunpack.c.l.b16 %v164
  %v201 = vunpack.c.l.b16 %v165
  %v202 = vunpack.c.l.b16 %v166
  %v203 = vunpack.c.l.b16 %v167
  %v204 = vpack.c.b16 %v189, %v188
  %v205 = vpack.c.b16 %v191, %v190
  %v206 = vpack.c.b16 %v193, %v192
  %v207 = vpack.c.b16 %v195, %v194
  %v208 = vpack.c.b16 %v197, %v196
  %v209 = vpack.c.b16 %v199, %v198
  %v210 = vpack.c.b16 %v201, %v200
  %v211 = vpack.c.b16 %v203, %v202
  %220 = vmatpush.bf16.msra.mxu0 %v211
  %221 = vmatpush.bf16.msra.mxu0 %v210
  %222 = vmatpush.bf16.msra.mxu0 %v209
  %223 = vmatpush.bf16.msra.mxu0 %v208
  %224 = vmatpush.bf16.msra.mxu0 %v207
  %225 = vmatpush.bf16.msra.mxu0 %v206
  %226 = vmatpush.bf16.msra.mxu0 %v205
  %227 = vmatpush.bf16.msra.mxu0 %v204
  %228 = vmatmul.bf16.gmra.mxu0 %v151
  %v229 = vpop.f32.mrf.mxu0
  %v230 = vadd.f32 %v170, %v229
  %v231 = vpop.f32.mrf.mxu0
  %v232 = vadd.f32 %v170, %v231
  %233 = vdwg.mxu0
  %vm234 = vcmask 31744
  %235 = vst.msk [vmem:[%s7] sm:$0xff] %vm234, %v230
  %236 = vst.msk [vmem:[%s7 + $0x8] sm:$0xff] %vm234, %v232
  // Predicated region
  $region30: #{deephit_net_forward.1} parent=0 // pred_check
    _
  $region31: #{deephit_net_forward.1} parent=0 // pred_check_branch
    %238 = sbr.rel (0) target = $region33
  $region32: #{deephit_net_forward.1} parent=0 // pred_region
    _
  $region33: #{deephit_net_forward.1} parent=0 // pred_fallthru
    _
  // Predicated region
  $region34: #{deephit_net_forward.1} parent=0 // pred_check
    _
  $region35: #{deephit_net_forward.1} parent=0 // pred_check_branch
    %240 = sbr.rel (0) target = $region37
  $region36: #{deephit_net_forward.1} parent=0 // pred_region
    _
  $region37: #{deephit_net_forward.1} parent=0 // pred_fallthru
    _

</llo_original>
